<compile_context>
chip_gen: v5e
topology: v5e:2x2
jax: 0.10.0
libtpu: 0.0.40
codegen_flags: <defaults>
</compile_context>

<pallas_src>
import functools

import jax
import jax.numpy as jnp
from jax.experimental import pallas as pl
from jax.experimental.pallas import tpu as pltpu


LANES = 128
SUBLANES = 8


# ---------------------------------------------------------------------------
# Kernel: per-(batch, half) partial sums of the L1 reconstruction term and the
# LPIPS-style perceptual surrogate, accumulated over spatial row-tiles.
# ---------------------------------------------------------------------------
def rec_perc_kernel(w_ref, x_ref, y_ref, l1_ref, perc_ref):
    """Partial sums for one (batch, half, row-tile) grid point.

    w_ref    : (C,) float32 in SMEM      (non-negative per-channel weights)
    x_ref    : (1, C, rows, 128)         native dtype; one sample's tile
    y_ref    : (1, C, rows, 128)
    l1_ref   : (1, 1, 8, 128) float32    resident accumulator across the tile axis
    perc_ref : (1, 1, 8, 128) float32    resident accumulator across the tile axis
    """
    t = pl.program_id(2)

    @pl.when(t == 0)
    def _():
        l1_ref[...] = jnp.zeros_like(l1_ref)
        perc_ref[...] = jnp.zeros_like(perc_ref)

    C = x_ref.shape[1]
    rows = x_ref.shape[2]

    # Hoisted SMEM scalar reads (C reads per step, outside the hot chain).
    ws = [w_ref[c] for c in range(C)]

    # Per-channel (rows, 128) slabs in f32. Channels live on a leading axis, so
    # all channel "reductions" below are plain elementwise vreg adds.
    xs = [x_ref[0, c].astype(jnp.float32) for c in range(C)]
    ys = [y_ref[0, c].astype(jnp.float32) for c in range(C)]

    # --- L1 reconstruction partial sums ---
    l1 = jnp.abs(xs[0] - ys[0])
    for c in range(1, C):
        l1 = l1 + jnp.abs(xs[c] - ys[c])

    # --- LPIPS-style perceptual surrogate ---
    # Per-pixel channel unit-normalization, squared diff, fixed non-negative
    # per-channel weights. Independent per spatial location, so tiling the
    # flattened (t h w) axis (and zero-padding it) is exact.
    eps = jnp.float32(1e-10)
    ssx = xs[0] * xs[0]
    ssy = ys[0] * ys[0]
    for c in range(1, C):
        ssx = ssx + xs[c] * xs[c]
        ssy = ssy + ys[c] * ys[c]
    inv_x = jax.lax.rsqrt(ssx + eps)   # EUP slot (free vs. the VALU stream)
    inv_y = jax.lax.rsqrt(ssy + eps)

    d0 = xs[0] * inv_x - ys[0] * inv_y
    dw = ws[0] * (d0 * d0)
    for c in range(1, C):
        dc = xs[c] * inv_x - ys[c] * inv_y
        dw = dw + ws[c] * (dc * dc)

    # Fold (rows, 128) -> (8, 128) with vreg-wise adds only (no cross-lane XLU,
    # no scalar splat); the final 8x128 -> scalar reduce happens once in the
    # wrapper, not once per grid step.
    l1_fold = jnp.sum(l1.reshape(rows // SUBLANES, SUBLANES, LANES), axis=0)
    dw_fold = jnp.sum(dw.reshape(rows // SUBLANES, SUBLANES, LANES), axis=0)

    l1_ref[...] = l1_ref[...] + l1_fold[None, None]
    perc_ref[...] = perc_ref[...] + dw_fold[None, None]


# ---------------------------------------------------------------------------
# Tiling helpers
# ---------------------------------------------------------------------------
def _round_up(x: int, m: int) -> int:
    return (x + m - 1) // m * m


def _pick_rows_tile(rows: int, n_channels: int, itemsize: int):
    """Return (rows_tile, rows_padded); both multiples of 8, rows_tile | rows_padded.

    VMEM per grid step ~= 2 inputs x 2 pipeline buffers x C*rows_tile*128*itemsize
    plus ~10 f32 intermediate (rows_tile, 128) slabs. Keep that under ~20 MiB so
    it sits comfortably inside the 32 MiB scoped-VMEM limit requested below on
    every generation (v5e default 16 MiB is raised; v7x has 64 MiB physical).
    For f32/C=3 this gives ~1.8K rows -> ~4.5 MiB of HBM traffic per step.
    """
    budget = 20 * 1024 * 1024
    per_row = 4 * n_channels * LANES * itemsize + 10 * LANES * 4
    max_rows = max(SUBLANES, min(2048, (budget // per_row) // SUBLANES * SUBLANES))
    if rows <= max_rows:
        return rows, rows
    # Largest multiple-of-8 divisor of `rows` within budget (keeps zero-copy views).
    best = SUBLANES
    for d in range(SUBLANES, max_rows + 1, SUBLANES):
        if rows % d == 0:
            best = d
    if best >= 128:
        return best, rows
    # Awkward row counts: zero-pad the row axis instead of using tiny tiles.
    return max_rows, _round_up(rows, max_rows)


# ---------------------------------------------------------------------------
# Wrapper (the VAELoss.forward equivalent, base path)
# ---------------------------------------------------------------------------
@functools.partial(
    jax.jit,
    static_argnames=(
        "reconstruction_loss_weight",
        "perceptual_loss_weight",
        "nll_loss_weight",
        "kl_loss_weight",
    ),
)
def vae_loss(
    samples,          # (B, C, T, H, W) native dtype (f32 or bf16)
    rec_samples,      # (B, C, T, H, W)
    post_mean,        # (B, Z, T, Hl, Wl)
    post_logvar,      # (B, Z, T, Hl, Wl)
    logvar_param,     # scalar learnable log-variance (init 0.0)
    perc_weights,     # (C,) non-negative perceptual channel weights
    *,
    reconstruction_loss_weight=1.0,
    perceptual_loss_weight=1.0,
    nll_loss_weight=1.0,
    kl_loss_weight=1.0,
):
    B, C, T, H, W = samples.shape
    THW = T * H * W
    N = B * T
    HW = H * W
    total_elems = B * C * THW
    itemsize = jnp.dtype(samples.dtype).itemsize

    # Flattened view in native dtype (no transpose, no upcast). If T*H*W is a
    # multiple of 1024 this is a zero-copy reshape; otherwise zero-pad the tail
    # (zeros contribute exactly 0 to both the L1 sum and the surrogate).
    x = samples.reshape(B, C, THW)
    y = rec_samples.reshape(B, C, THW)

    R = _round_up(THW, SUBLANES * LANES) // LANES       # rows of 128 lanes
    rows_tile, R_pad = _pick_rows_tile(R, C, itemsize)
    THW_pad = R_pad * LANES
    if THW_pad != THW:
        x = jnp.pad(x, ((0, 0), (0, 0), (0, THW_pad - THW)))
        y = jnp.pad(y, ((0, 0), (0, 0), (0, THW_pad - THW)))
    x = x.reshape(B, C, R_pad, LANES)
    y = y.reshape(B, C, R_pad, LANES)
    w = perc_weights.astype(jnp.float32)                # (C,) -> SMEM

    n_tiles = R_pad // rows_tile
    # Split the tile axis into two "parallel" halves so both v7x TensorCores
    # stay busy even when B is 1 or odd. Neutral on single-core v5e/v6e.
    P = 2 if (n_tiles % 2 == 0 and n_tiles >= 2) else 1
    tiles_per_p = n_tiles // P

    cost = pl.CostEstimate(
        flops=int(14 * B * C * THW_pad + 6 * B * THW_pad),
        transcendentals=int(2 * B * THW_pad),
        bytes_accessed=int(2 * B * C * THW_pad * itemsize
                           + 2 * B * P * SUBLANES * LANES * 4),
    )

    l1_acc, perc_acc = pl.pallas_call(
        rec_perc_kernel,
        out_shape=(
            jax.ShapeDtypeStruct((B, P, SUBLANES, LANES), jnp.float32),
            jax.ShapeDtypeStruct((B, P, SUBLANES, LANES), jnp.float32),
        ),
        grid_spec=pltpu.PrefetchScalarGridSpec(
            num_scalar_prefetch=0,
            grid=(B, P, tiles_per_p),
            in_specs=[
                pl.BlockSpec(memory_space=pltpu.MemorySpace.SMEM),   # weights
                pl.BlockSpec((1, C, rows_tile, LANES),
                             lambda b, p, t: (b, 0, p * tiles_per_p + t, 0)),
                pl.BlockSpec((1, C, rows_tile, LANES),
                             lambda b, p, t: (b, 0, p * tiles_per_p + t, 0)),
            ],
            out_specs=[
                pl.BlockSpec((1, 1, SUBLANES, LANES), lambda b, p, t: (b, p, 0, 0)),
                pl.BlockSpec((1, 1, SUBLANES, LANES), lambda b, p, t: (b, p, 0, 0)),
            ],
        ),
        compiler_params=pltpu.CompilerParams(
            dimension_semantics=("parallel", "parallel", "arbitrary"),
            vmem_limit_bytes=32 * 1024 * 1024,
        ),
        cost_estimate=cost,
    )(w, x, y)

    # Single cross-lane reduction of the lane/sublane-vector accumulators.
    l1_total = jnp.sum(l1_acc)
    perc_total = jnp.sum(perc_acc)

    # F.l1_loss (mean over every element).
    loss_rec = l1_total / jnp.float32(total_elems)
    # Mean over the N=(b t) samples of the per-sample spatial mean; exact
    # because every sample has identical H*W.
    loss_perceptual = perc_total / jnp.float32(N * HW)

    # --- KL term (tiny; plain jnp — a dedicated kernel costs more than the work) ---
    pm = post_mean.reshape(B, -1).astype(jnp.float32)
    plv = post_logvar.reshape(B, -1).astype(jnp.float32)
    kl_per_sample = 0.5 * jnp.sum(pm * pm + jnp.exp(plv) - 1.0 - plv, axis=-1)
    loss_kl = jnp.sum(kl_per_sample) / jnp.float32(B)

    # --- NLL: ((w_r*rec + w_p*perc)/exp(lv) + lv); exp(lv) is a scalar, so this
    # equals the per-sample form followed by sum()/N.
    loss_nll = (
        reconstruction_loss_weight * loss_rec
        + perceptual_loss_weight * loss_perceptual
    ) / jnp.exp(logvar_param) + logvar_param

    loss = nll_loss_weight * loss_nll + kl_loss_weight * loss_kl

    loss_dict = {
        "loss_rec": loss_rec,
        "loss_perceptual": loss_perceptual,
        "loss_nll": loss_nll,
        "loss_kl": loss_kl,
        "loss": loss,
    }
    return loss, loss_dict


# ---------------------------------------------------------------------------
# Demo
# ---------------------------------------------------------------------------
if __name__ == "__main__":
    key = jax.random.PRNGKey(0)
    k1, k2, k3, k4, k5 = jax.random.split(key, 5)

    B, C, T, H, W = 2, 3, 4, 16, 16       # video: batch, channels, frames, spatial
    Z, Hl, Wl = 4, 4, 4                   # latent posterior shape (4x downsample)

    samples = jax.random.normal(k1, (B, C, T, H, W), dtype=jnp.float32)
    rec_samples = samples + 0.1 * jax.random.normal(k2, (B, C, T, H, W), dtype=jnp.float32)
    post_mean = jax.random.normal(k3, (B, Z, T, Hl, Wl), dtype=jnp.float32)
    post_logvar = 0.1 * jax.random.normal(k4, (B, Z, T, Hl, Wl), dtype=jnp.float32)

    # Deterministic parameter init (module __init__): logvar = 0.0 scalar param;
    # perceptual channel weights: non-negative, deterministic from PRNGKey(0).
    logvar_param = jnp.float32(0.0)
    perc_weights = jax.random.uniform(k5, (C,), dtype=jnp.float32, minval=0.0, maxval=1.0)

    loss, loss_dict = vae_loss(
        samples,
        rec_samples,
        post_mean,
        post_logvar,
        logvar_param,
        perc_weights,
    )
    jax.block_until_ready(loss)
    jax.block_until_ready(loss_dict)
    print("KERNEL_OK")
</pallas_src>

<mosaic_0001>
module attributes {stable_mosaic.version = 11 : i64} {
  func.func @rec_perc_kernel(%arg0: i32, %arg1: i32, %arg2: i32, %arg3: memref<3xf32, #tpu.memory_space<smem>>, %arg4: memref<1x3x8x128xf32, #tpu.memory_space<vmem>>, %arg5: memref<1x3x8x128xf32, #tpu.memory_space<vmem>>, %arg6: memref<1x1x8x128xf32, #tpu.memory_space<vmem>>, %arg7: memref<1x1x8x128xf32, #tpu.memory_space<vmem>>) attributes {dimension_semantics = [#tpu.dimension_semantics<parallel>, #tpu.dimension_semantics<parallel>, #tpu.dimension_semantics<arbitrary>], iteration_bounds = array<i64: 2, 1, 1>, scalar_prefetch = 0 : i64, scratch_operands = 0 : i64, tpu.core_type = #tpu.core_type<tc>, window_params = [{transform_indices = @transform_0, window_bounds = array<i64: 3>}, {transform_indices = @transform_1, window_bounds = array<i64: 1, 3, 8, 128>}, {transform_indices = @transform_2, window_bounds = array<i64: 1, 3, 8, 128>}, {transform_indices = @transform_3, window_bounds = array<i64: 1, 1, 8, 128>}, {transform_indices = @transform_4, window_bounds = array<i64: 1, 1, 8, 128>}]} {
    %c0_i32 = arith.constant 0 : i32
    %0 = arith.cmpi eq, %arg2, %c0_i32 : i32
    %1 = arith.extui %0 : i1 to i32
    %c0_i32_0 = arith.constant 0 : i32
    %2 = arith.cmpi ne, %1, %c0_i32_0 : i32
    scf.if %2 {
      %cst_44 = arith.constant 0.000000e+00 : f32
      %74 = vector.broadcast %cst_44 : f32 to vector<1x1x8x128xf32>
      %c0_45 = arith.constant 0 : index
      %c0_46 = arith.constant 0 : index
      %c0_47 = arith.constant 0 : index
      %c0_48 = arith.constant 0 : index
      %75 = vector.load %arg6[%c0_45, %c0_46, %c0_47, %c0_48] : memref<1x1x8x128xf32, #tpu.memory_space<vmem>>, vector<1x1x8x128xf32>
      tpu.vector_store %arg6[%c0_45, %c0_46, %c0_47, %c0_48], %74 {strides = array<i32>} : memref<1x1x8x128xf32, #tpu.memory_space<vmem>>, vector<1x1x8x128xf32>,
      %cst_49 = arith.constant 0.000000e+00 : f32
      %76 = vector.broadcast %cst_49 : f32 to vector<1x1x8x128xf32>
      %c0_50 = arith.constant 0 : index
      %c0_51 = arith.constant 0 : index
      %c0_52 = arith.constant 0 : index
      %c0_53 = arith.constant 0 : index
      %77 = vector.load %arg7[%c0_50, %c0_51, %c0_52, %c0_53] : memref<1x1x8x128xf32, #tpu.memory_space<vmem>>, vector<1x1x8x128xf32>
      tpu.vector_store %arg7[%c0_50, %c0_51, %c0_52, %c0_53], %76 {strides = array<i32>} : memref<1x1x8x128xf32, #tpu.memory_space<vmem>>, vector<1x1x8x128xf32>,
    } else {
    }
    %c0 = arith.constant 0 : index
    %3 = memref.load %arg3[%c0] : memref<3xf32, #tpu.memory_space<smem>>
    %c1 = arith.constant 1 : index
    %4 = memref.load %arg3[%c1] : memref<3xf32, #tpu.memory_space<smem>>
    %c2 = arith.constant 2 : index
    %5 = memref.load %arg3[%c2] : memref<3xf32, #tpu.memory_space<smem>>
    %c0_1 = arith.constant 0 : index
    %c0_2 = arith.constant 0 : index
    %c0_3 = arith.constant 0 : index
    %c0_4 = arith.constant 0 : index
    %6 = vector.load %arg4[%c0_1, %c0_2, %c0_3, %c0_4] : memref<1x3x8x128xf32, #tpu.memory_space<vmem>>, vector<1x1x8x128xf32>
    %7 = vector.shape_cast %6 : vector<1x1x8x128xf32> to vector<8x128xf32>
    %c0_5 = arith.constant 0 : index
    %c1_6 = arith.constant 1 : index
    %c0_7 = arith.constant 0 : index
    %c0_8 = arith.constant 0 : index
    %8 = vector.load %arg4[%c0_5, %c1_6, %c0_7, %c0_8] : memref<1x3x8x128xf32, #tpu.memory_space<vmem>>, vector<1x1x8x128xf32>
    %9 = vector.shape_cast %8 : vector<1x1x8x128xf32> to vector<8x128xf32>
    %c0_9 = arith.constant 0 : index
    %c2_10 = arith.constant 2 : index
    %c0_11 = arith.constant 0 : index
    %c0_12 = arith.constant 0 : index
    %10 = vector.load %arg4[%c0_9, %c2_10, %c0_11, %c0_12] : memref<1x3x8x128xf32, #tpu.memory_space<vmem>>, vector<1x1x8x128xf32>
    %11 = vector.shape_cast %10 : vector<1x1x8x128xf32> to vector<8x128xf32>
    %c0_13 = arith.constant 0 : index
    %c0_14 = arith.constant 0 : index
    %c0_15 = arith.constant 0 : index
    %c0_16 = arith.constant 0 : index
    %12 = vector.load %arg5[%c0_13, %c0_14, %c0_15, %c0_16] : memref<1x3x8x128xf32, #tpu.memory_space<vmem>>, vector<1x1x8x128xf32>
    %13 = vector.shape_cast %12 : vector<1x1x8x128xf32> to vector<8x128xf32>
    %c0_17 = arith.constant 0 : index
    %c1_18 = arith.constant 1 : index
    %c0_19 = arith.constant 0 : index
    %c0_20 = arith.constant 0 : index
    %14 = vector.load %arg5[%c0_17, %c1_18, %c0_19, %c0_20] : memref<1x3x8x128xf32, #tpu.memory_space<vmem>>, vector<1x1x8x128xf32>
    %15 = vector.shape_cast %14 : vector<1x1x8x128xf32> to vector<8x128xf32>
    %c0_21 = arith.constant 0 : index
    %c2_22 = arith.constant 2 : index
    %c0_23 = arith.constant 0 : index
    %c0_24 = arith.constant 0 : index
    %16 = vector.load %arg5[%c0_21, %c2_22, %c0_23, %c0_24] : memref<1x3x8x128xf32, #tpu.memory_space<vmem>>, vector<1x1x8x128xf32>
    %17 = vector.shape_cast %16 : vector<1x1x8x128xf32> to vector<8x128xf32>
    %18 = arith.subf %7, %13 : vector<8x128xf32>
    %19 = math.absf %18 : vector<8x128xf32>
    %20 = arith.subf %9, %15 : vector<8x128xf32>
    %21 = math.absf %20 : vector<8x128xf32>
    %22 = arith.addf %19, %21 : vector<8x128xf32>
    %23 = arith.subf %11, %17 : vector<8x128xf32>
    %24 = math.absf %23 : vector<8x128xf32>
    %25 = arith.addf %22, %24 : vector<8x128xf32>
    %26 = arith.mulf %7, %7 : vector<8x128xf32>
    %27 = arith.mulf %13, %13 : vector<8x128xf32>
    %28 = arith.mulf %9, %9 : vector<8x128xf32>
    %29 = arith.addf %26, %28 : vector<8x128xf32>
    %30 = arith.mulf %15, %15 : vector<8x128xf32>
    %31 = arith.addf %27, %30 : vector<8x128xf32>
    %32 = arith.mulf %11, %11 : vector<8x128xf32>
    %33 = arith.addf %29, %32 : vector<8x128xf32>
    %34 = arith.mulf %17, %17 : vector<8x128xf32>
    %35 = arith.addf %31, %34 : vector<8x128xf32>
    %cst = arith.constant 1.000000e-10 : f32
    %36 = vector.broadcast %cst : f32 to vector<8x128xf32>
    %37 = arith.addf %33, %36 : vector<8x128xf32>
    %38 = math.rsqrt %37 : vector<8x128xf32>
    %cst_25 = arith.constant 1.000000e-10 : f32
    %39 = vector.broadcast %cst_25 : f32 to vector<8x128xf32>
    %40 = arith.addf %35, %39 : vector<8x128xf32>
    %41 = math.rsqrt %40 : vector<8x128xf32>
    %42 = arith.mulf %7, %38 : vector<8x128xf32>
    %43 = arith.mulf %13, %41 : vector<8x128xf32>
    %44 = arith.subf %42, %43 : vector<8x128xf32>
    %45 = arith.mulf %44, %44 : vector<8x128xf32>
    %46 = vector.broadcast %3 : f32 to vector<8x128xf32>
    %47 = arith.mulf %46, %45 : vector<8x128xf32>
    %48 = arith.mulf %9, %38 : vector<8x128xf32>
    %49 = arith.mulf %15, %41 : vector<8x128xf32>
    %50 = arith.subf %48, %49 : vector<8x128xf32>
    %51 = arith.mulf %50, %50 : vector<8x128xf32>
    %52 = vector.broadcast %4 : f32 to vector<8x128xf32>
    %53 = arith.mulf %52, %51 : vector<8x128xf32>
    %54 = arith.addf %47, %53 : vector<8x128xf32>
    %55 = arith.mulf %11, %38 : vector<8x128xf32>
    %56 = arith.mulf %17, %41 : vector<8x128xf32>
    %57 = arith.subf %55, %56 : vector<8x128xf32>
    %58 = arith.mulf %57, %57 : vector<8x128xf32>
    %59 = vector.broadcast %5 : f32 to vector<8x128xf32>
    %60 = arith.mulf %59, %58 : vector<8x128xf32>
    %61 = arith.addf %54, %60 : vector<8x128xf32>
    %62 = vector.shape_cast %25 : vector<8x128xf32> to vector<1x8x128xf32>
    %cst_26 = arith.constant dense<0.000000e+00> : vector<8x128xf32>
    %63 = vector.multi_reduction <add>, %62, %cst_26 [0] : vector<1x8x128xf32> to vector<8x128xf32>
    %64 = vector.shape_cast %61 : vector<8x128xf32> to vector<1x8x128xf32>
    %cst_27 = arith.constant dense<0.000000e+00> : vector<8x128xf32>
    %65 = vector.multi_reduction <add>, %64, %cst_27 [0] : vector<1x8x128xf32> to vector<8x128xf32>
    %c0_28 = arith.constant 0 : index
    %c0_29 = arith.constant 0 : index
    %c0_30 = arith.constant 0 : index
    %c0_31 = arith.constant 0 : index
    %66 = vector.load %arg6[%c0_28, %c0_29, %c0_30, %c0_31] : memref<1x1x8x128xf32, #tpu.memory_space<vmem>>, vector<1x1x8x128xf32>
    %67 = vector.shape_cast %63 : vector<8x128xf32> to vector<1x1x8x128xf32>
    %68 = arith.addf %66, %67 : vector<1x1x8x128xf32>
    %c0_32 = arith.constant 0 : index
    %c0_33 = arith.constant 0 : index
    %c0_34 = arith.constant 0 : index
    %c0_35 = arith.constant 0 : index
    %69 = vector.load %arg6[%c0_32, %c0_33, %c0_34, %c0_35] : memref<1x1x8x128xf32, #tpu.memory_space<vmem>>, vector<1x1x8x128xf32>
    tpu.vector_store %arg6[%c0_32, %c0_33, %c0_34, %c0_35], %68 {strides = array<i32>} : memref<1x1x8x128xf32, #tpu.memory_space<vmem>>, vector<1x1x8x128xf32>,
    %c0_36 = arith.constant 0 : index
    %c0_37 = arith.constant 0 : index
    %c0_38 = arith.constant 0 : index
    %c0_39 = arith.constant 0 : index
    %70 = vector.load %arg7[%c0_36, %c0_37, %c0_38, %c0_39] : memref<1x1x8x128xf32, #tpu.memory_space<vmem>>, vector<1x1x8x128xf32>
    %71 = vector.shape_cast %65 : vector<8x128xf32> to vector<1x1x8x128xf32>
    %72 = arith.addf %70, %71 : vector<1x1x8x128xf32>
    %c0_40 = arith.constant 0 : index
    %c0_41 = arith.constant 0 : index
    %c0_42 = arith.constant 0 : index
    %c0_43 = arith.constant 0 : index
    %73 = vector.load %arg7[%c0_40, %c0_41, %c0_42, %c0_43] : memref<1x1x8x128xf32, #tpu.memory_space<vmem>>, vector<1x1x8x128xf32>
    tpu.vector_store %arg7[%c0_40, %c0_41, %c0_42, %c0_43], %72 {strides = array<i32>} : memref<1x1x8x128xf32, #tpu.memory_space<vmem>>, vector<1x1x8x128xf32>,
    return
  }
  func.func @transform_0(%arg0: i32, %arg1: i32, %arg2: i32) -> i32 {
    %c0_i32 = arith.constant 0 : i32
    %c0_i32_0 = arith.constant 0 : i32
    return %c0_i32 : i32
  }
  func.func @transform_1(%arg0: i32, %arg1: i32, %arg2: i32) -> (i32, i32, i32, i32) {
    %c1_i32 = arith.constant 1 : i32
    %0 = arith.muli %arg1, %c1_i32 : i32
    %1 = arith.addi %0, %arg2 : i32
    %c0_i32 = arith.constant 0 : i32
    %c0_i32_0 = arith.constant 0 : i32
    %c0_i32_1 = arith.constant 0 : i32
    return %arg0, %c0_i32, %1, %c0_i32_0 : i32, i32, i32, i32
  }
  func.func @transform_2(%arg0: i32, %arg1: i32, %arg2: i32) -> (i32, i32, i32, i32) {
    %c1_i32 = arith.constant 1 : i32
    %0 = arith.muli %arg1, %c1_i32 : i32
    %1 = arith.addi %0, %arg2 : i32
    %c0_i32 = arith.constant 0 : i32
    %c0_i32_0 = arith.constant 0 : i32
    %c0_i32_1 = arith.constant 0 : i32
    return %arg0, %c0_i32, %1, %c0_i32_0 : i32, i32, i32, i32
  }
  func.func @transform_3(%arg0: i32, %arg1: i32, %arg2: i32) -> (i32, i32, i32, i32) {
    %c0_i32 = arith.constant 0 : i32
    %c0_i32_0 = arith.constant 0 : i32
    %c0_i32_1 = arith.constant 0 : i32
    return %arg0, %arg1, %c0_i32, %c0_i32_0 : i32, i32, i32, i32
  }
  func.func @transform_4(%arg0: i32, %arg1: i32, %arg2: i32) -> (i32, i32, i32, i32) {
    %c0_i32 = arith.constant 0 : i32
    %c0_i32_0 = arith.constant 0 : i32
    %c0_i32_1 = arith.constant 0 : i32
    return %arg0, %arg1, %c0_i32, %c0_i32_0 : i32, i32, i32, i32
  }
}

</mosaic_0001>

<llo_original>
// kernel: vae_loss.1
$region0: #{vae_loss.1}
  #allocation0 [shape = 'u32[]', space=smem, size = 0x4, offset = 0x4, fixed_abs, tag = 'smem constant byte address 0x4 - core index']
  #allocation1 [shape = 'u32[72,128]{1,0:T(1,128)}', space=vmem, size = 0x9000, scoped, tag = 'internal scratch']
  %s0 = inlined_call_operand.vmem [shape: f32[3], index: 0, kind: input, shape index: {}]
  %s1 = inlined_call_operand.vmem [shape: f32[2,3,8,128], index: 1, kind: input, shape index: {}]
  %s2 = inlined_call_operand.vmem [shape: f32[2,3,8,128], index: 2, kind: input, shape index: {}]
  %s3 = inlined_call_operand.vmem [shape: f32[2,1,8,128], index: 3, kind: output, shape index: {0}]
  %s4 = inlined_call_operand.vmem [shape: f32[2,1,8,128], index: 4, kind: output, shape index: {1}]
  %5 = xla_tuple %s3, %s4
  %s6 = sld [smem:[#allocation0]]
  $region61: #{vae_loss.1} parent=0
    _
  %s8 = ssub.s32 1, %s6
  %s9 = scalar_select 0, %s8, %s6
  $region1: #{vae_loss.1} parent=0
    #allocation2 [shape = 'u8[512]{0}', space=smem, size = 0x200, scoped, tag = 'input window, operand 0, single buffered']
    #allocation3 [shape = 's32[2]{0}', space=sflag, size = 0x8, scoped, tag = 'scoped memory for vae_loss.1']
    %10 = vsyncpa [#allocation3], 0
    loop: start=0, step=1, limit=4
    $region2: #{vae_loss.1} parent=1 // loop_pre_header
      _
    $region3: #{vae_loss.1} parent=1 // loop_header
      %s12 = sphi 0, %s16
      %p13 = scmp.ge.s32.totalorder %s12, 4
      %s19 = sphi 0, %s38
      %s20 = sphi 0, %s34
      %s21 = sphi 0, %s30
      %s22 = sphi 0, %s19
      %s23 = sphi 0, %s20
      %s24 = sphi 0, %s21
      %s25 = sphi 0, %s22
      %s26 = sphi 0, %s23
      %s27 = sphi 0, %s24
      %s39 = sphi 0, %s39
      %s41 = sphi 0, %s39
      %s42 = sphi 0, %s41
      %s56 = sphi 0, %s42
      %s66 = sphi 0, %s68
      %s69 = sphi 0, %s66
      %s70 = sphi 0, %s69
      %s86 = sphi 0, %s70
      %s96 = sphi 0, %s98
      %s99 = sphi 0, %s96
      %s100 = sphi 0, %s99
      %s116 = sphi 0, %s100
      %s124 = sphi 0, %s126
      %s127 = sphi 0, %s124
      %s128 = sphi 0, %s127
      %s144 = sphi 0, %s128
      %s152 = sphi 0, %s154
      %s155 = sphi 0, %s152
      %s156 = sphi 0, %s155
      %s172 = sphi 0, %s156
    $region4: #{vae_loss.1} parent=1 // loop_header_branch
      %15 = sbr.rel (%p13) target = $region8
    $region5: #{vae_loss.1} parent=1 // loop_body
      %s17 = ssub.s32 %s12, 1
      %s18 = ssub.s32 %s12, 2
      %s28 = sadd.s32 1, %s21
      %p29 = scmp.ge.s32.totalorder %s28, 1
      %s30 = scalar_select %p29, 0, %s28
      %s31 = sadd.s32 1, %s20
      %s32 = scalar_select %p29, %s31, %s20
      %p33 = scmp.ge.s32.totalorder %s32, 1
      %s34 = scalar_select %p33, 0, %s32
      %s35 = sadd.s32 1, %s19
      %s36 = scalar_select %p33, %s35, %s19
      %p37 = scmp.ge.s32.totalorder %s36, 2
      %s38 = scalar_select %p37, 0, %s36
      %s40 = sadd.s32 %s39, 1
      %p43 = scmp.eq.s32.totalorder %s12, 1
      %p44 = scmp.ne.s32.totalorder %s39, %s41
      %p45 = scmp.eq.s32.totalorder %s12, 0
      %p46 = por %p44, %p45
      %p47 = scmp.ne.s32.totalorder %s39, %s41
      %p48 = scmp.eq.s32.totalorder %s17, 1
      %p49 = por %p47, %p48
      %p50 = scmp.ne.s32.totalorder %s41, %s42
      %p51 = scmp.eq.s32.totalorder %s17, 0
      %p52 = por %p50, %p51
      %p53 = scmp.ne.s32.totalorder %s41, %s42
      %p54 = scmp.eq.s32.totalorder %s18, 1
      %p55 = por %p53, %p54
      %p57 = scmp.ne.s32.totalorder %s42, %s56
      %p58 = scmp.eq.s32.totalorder %s18, 0
      %p59 = por %p57, %p58
      %s60 = sadd.s32 %s20, %s21
      %s61 = sadd.s32 %s34, %s30
      %s62 = ssub.s32 %s19, %s38
      %s63 = ssub.s32 %s60, %s61
      %s64 = sor.u32 %s62, %s63
      %p65 = scmp.eq.s32.totalorder %s64, 0
      %s67 = sadd.s32 %s66, 1
      %s68 = scalar_select %p65, %s66, %s67
      %p71 = pneg %p65
      %p72 = scmp.eq.s32.totalorder %s12, 1
      %p73 = por %p71, %p72
      %p74 = scmp.ne.s32.totalorder %s66, %s69
      %p75 = scmp.eq.s32.totalorder %s12, 0
      %p76 = por %p74, %p75
      %p77 = scmp.ne.s32.totalorder %s66, %s69
      %p78 = scmp.eq.s32.totalorder %s17, 1
      %p79 = por %p77, %p78
      %p80 = scmp.ne.s32.totalorder %s69, %s70
      %p81 = scmp.eq.s32.totalorder %s17, 0
      %p82 = por %p80, %p81
      %p83 = scmp.ne.s32.totalorder %s69, %s70
      %p84 = scmp.eq.s32.totalorder %s18, 1
      %p85 = por %p83, %p84
      %p87 = scmp.ne.s32.totalorder %s70, %s86
      %p88 = scmp.eq.s32.totalorder %s18, 0
      %p89 = por %p87, %p88
      %s90 = sadd.s32 %s20, %s21
      %s91 = sadd.s32 %s34, %s30
      %s92 = ssub.s32 %s19, %s38
      %s93 = ssub.s32 %s90, %s91
      %s94 = sor.u32 %s92, %s93
      %p95 = scmp.eq.s32.totalorder %s94, 0
      %s97 = sadd.s32 %s96, 1
      %s98 = scalar_select %p95, %s96, %s97
      %p101 = pneg %p95
      %p102 = scmp.eq.s32.totalorder %s12, 1
      %p103 = por %p101, %p102
      %p104 = scmp.ne.s32.totalorder %s96, %s99
      %p105 = scmp.eq.s32.totalorder %s12, 0
      %p106 = por %p104, %p105
      %p107 = scmp.ne.s32.totalorder %s96, %s99
      %p108 = scmp.eq.s32.totalorder %s17, 1
      %p109 = por %p107, %p108
      %p110 = scmp.ne.s32.totalorder %s99, %s100
      %p111 = scmp.eq.s32.totalorder %s17, 0
      %p112 = por %p110, %p111
      %p113 = scmp.ne.s32.totalorder %s99, %s100
      %p114 = scmp.eq.s32.totalorder %s18, 1
      %p115 = por %p113, %p114
      %p117 = scmp.ne.s32.totalorder %s100, %s116
      %p118 = scmp.eq.s32.totalorder %s18, 0
      %p119 = por %p117, %p118
      %s120 = ssub.s32 %s19, %s38
      %s121 = ssub.s32 %s20, %s34
      %s122 = sor.u32 %s120, %s121
      %p123 = scmp.eq.s32.totalorder %s122, 0
      %s125 = sadd.s32 %s124, 1
      %s126 = scalar_select %p123, %s124, %s125
      %p129 = pneg %p123
      %p130 = scmp.eq.s32.totalorder %s12, 1
      %p131 = por %p129, %p130
      %p132 = scmp.ne.s32.totalorder %s124, %s127
      %p133 = scmp.eq.s32.totalorder %s12, 0
      %p134 = por %p132, %p133
      %p135 = scmp.ne.s32.totalorder %s124, %s127
      %p136 = scmp.eq.s32.totalorder %s17, 1
      %p137 = por %p135, %p136
      %p138 = scmp.ne.s32.totalorder %s127, %s128
      %p139 = scmp.eq.s32.totalorder %s17, 0
      %p140 = por %p138, %p139
      %p141 = scmp.ne.s32.totalorder %s127, %s128
      %p142 = scmp.eq.s32.totalorder %s18, 1
      %p143 = por %p141, %p142
      %p145 = scmp.ne.s32.totalorder %s128, %s144
      %p146 = scmp.eq.s32.totalorder %s18, 0
      %p147 = por %p145, %p146
      %s148 = ssub.s32 %s19, %s38
      %s149 = ssub.s32 %s20, %s34
      %s150 = sor.u32 %s148, %s149
      %p151 = scmp.eq.s32.totalorder %s150, 0
      %s153 = sadd.s32 %s152, 1
      %s154 = scalar_select %p151, %s152, %s153
      %p157 = pneg %p151
      %p158 = scmp.eq.s32.totalorder %s12, 1
      %p159 = por %p157, %p158
      %p160 = scmp.ne.s32.totalorder %s152, %s155
      %p161 = scmp.eq.s32.totalorder %s12, 0
      %p162 = por %p160, %p161
      %p163 = scmp.ne.s32.totalorder %s152, %s155
      %p164 = scmp.eq.s32.totalorder %s17, 1
      %p165 = por %p163, %p164
      %p166 = scmp.ne.s32.totalorder %s155, %s156
      %p167 = scmp.eq.s32.totalorder %s17, 0
      %p168 = por %p166, %p167
      %p169 = scmp.ne.s32.totalorder %s155, %s156
      %p170 = scmp.eq.s32.totalorder %s18, 1
      %p171 = por %p169, %p170
      %p173 = scmp.ne.s32.totalorder %s156, %s172
      %p174 = scmp.eq.s32.totalorder %s18, 0
      %p175 = por %p173, %p174
      %p176 = scmp.le.s32.totalorder 1, %s12
      %p177 = scmp.lt.s32.totalorder %s12, 3
      %p178 = pnand %p176, %p177
      %p179 = pneg %p178
      // Predicated region
      $region9: #{vae_loss.1} parent=5 // pred_check
        _
      $region10: #{vae_loss.1} parent=5 // pred_check_branch
        %181 = sbr.rel (%p178) target = $region12
      $region11: #{vae_loss.1} parent=5 // pred_region
        %s182 = ssub.s32 %s12, 1
        // Predicated region
        $region13: #{vae_loss.1} parent=11 // pred_check
          %p183 = pneg %p52
        $region14: #{vae_loss.1} parent=11 // pred_check_branch
          %185 = sbr.rel (%p183) target = $region16
        $region15: #{vae_loss.1} parent=11 // pred_region
          %187 = vsyncadd [#allocation3], 0
          %s189 = sshll.u32 %s0, 4
          %s190 = int_to_ptr.vmem [resolvable:$true] %s189
          %192 = dma.vmem_to_smem %s190, 16, [#allocation2], [#allocation3]
        $region16: #{vae_loss.1} parent=11 // pred_fallthru
          _
      $region12: #{vae_loss.1} parent=5 // pred_fallthru
        _
      %p193 = scmp.lt.s32.totalorder %s12, 2
      // Predicated region
      $region17: #{vae_loss.1} parent=5 // pred_check
        %p194 = pneg %p193
      $region18: #{vae_loss.1} parent=5 // pred_check_branch
        %196 = sbr.rel (%p194) target = $region20
      $region19: #{vae_loss.1} parent=5 // pred_region
        // Predicated region
        $region21: #{vae_loss.1} parent=19 // pred_check
          %p197 = pneg %p76
        $region22: #{vae_loss.1} parent=19 // pred_check_branch
          %199 = sbr.rel (%p197) target = $region24
        $region23: #{vae_loss.1} parent=19 // pred_region
          %s200 = sadd.s32 %s20, %s21
          %p201 = scmp.lt.s32.totalorder %s19, 1
          %s202 = scalar_select %p201, %s19, 1
          %p203 = scmp.lt.s32.totalorder %s200, 0
          %s204 = scalar_select %p203, %s200, 0
          %s205 = smul.addr %s202, 3
          %s206 = sadd.s32 %s204, %s205
          %s207 = smul.addr %s206, 8
          %s208 = scalar_lea.vmem %s1, %s207
          %s209 = sadd.s32 %s20, %s21
        $region24: #{vae_loss.1} parent=19 // pred_fallthru
          _
        // Predicated region
        $region25: #{vae_loss.1} parent=19 // pred_check
          %p210 = pneg %p106
        $region26: #{vae_loss.1} parent=19 // pred_check_branch
          %212 = sbr.rel (%p210) target = $region28
        $region27: #{vae_loss.1} parent=19 // pred_region
          %s213 = sadd.s32 %s20, %s21
          %p214 = scmp.lt.s32.totalorder %s19, 1
          %s215 = scalar_select %p214, %s19, 1
          %p216 = scmp.lt.s32.totalorder %s213, 0
          %s217 = scalar_select %p216, %s213, 0
          %s218 = smul.addr %s215, 3
          %s219 = sadd.s32 %s217, %s218
          %s220 = smul.addr %s219, 8
          %s221 = scalar_lea.vmem %s2, %s220
          %s222 = sadd.s32 %s20, %s21
        $region28: #{vae_loss.1} parent=19 // pred_fallthru
          _
      $region20: #{vae_loss.1} parent=5 // pred_fallthru
        _
      %p223 = scmp.le.s32.totalorder 1, %s12
      %p224 = scmp.lt.s32.totalorder %s12, 3
      %p225 = pnand %p223, %p224
      %p226 = pneg %p225
      // Predicated region
      $region29: #{vae_loss.1} parent=5 // pred_check
        _
      $region30: #{vae_loss.1} parent=5 // pred_check_branch
        %228 = sbr.rel (%p225) target = $region32
      $region31: #{vae_loss.1} parent=5 // pred_region
        %s229 = ssub.s32 %s12, 1
        // Predicated region
        $region33: #{vae_loss.1} parent=31 // pred_check
          %p230 = pneg %p52
        $region34: #{vae_loss.1} parent=31 // pred_check_branch
          %232 = sbr.rel (%p230) target = $region36
        $region35: #{vae_loss.1} parent=31 // pred_region
          %234 = dma.done [#allocation3], 16
        $region36: #{vae_loss.1} parent=31 // pred_fallthru
          _
        %235 = sfence
        %p236 = pneg %p52
        %p237 = pneg %p49
        %s238 = sadd.s32 %s23, %s24
        %p239 = scmp.lt.s32.totalorder %s22, 1
        %s240 = scalar_select %p239, %s22, 1
        %p241 = scmp.lt.s32.totalorder %s238, 0
        %s242 = scalar_select %p241, %s238, 0
        %s243 = smul.addr %s240, 3
        %s244 = sadd.s32 %s242, %s243
        %s245 = smul.addr %s244, 8
        %s246 = scalar_lea.vmem %s1, %s245
        %p247 = pneg %p82
        %p248 = pneg %p79
        %s249 = sadd.s32 %s23, %s24
        %p250 = scmp.lt.s32.totalorder %s22, 1
        %s251 = scalar_select %p250, %s22, 1
        %p252 = scmp.lt.s32.totalorder %s249, 0
        %s253 = scalar_select %p252, %s249, 0
        %s254 = smul.addr %s251, 3
        %s255 = sadd.s32 %s253, %s254
        %s256 = smul.addr %s255, 8
        %s257 = scalar_lea.vmem %s2, %s256
        %p258 = pneg %p112
        %p259 = pneg %p109
        %p260 = pneg %p140
        %p261 = pneg %p137
        %p262 = scmp.lt.s32.totalorder %s22, 1
        %s263 = scalar_select %p262, %s22, 1
        %p264 = scmp.lt.s32.totalorder %s23, 0
        %s265 = scalar_select %p264, %s23, 0
        %s266 = sadd.s32 %s265, %s263
        %s267 = smul.addr %s266, 8
        %s268 = scalar_lea.vmem %s3, %s267
        %p269 = pneg %p168
        %p270 = pneg %p165
        %p271 = scmp.lt.s32.totalorder %s22, 1
        %s272 = scalar_select %p271, %s22, 1
        %p273 = scmp.lt.s32.totalorder %s23, 0
        %s274 = scalar_select %p273, %s23, 0
        %s275 = sadd.s32 %s274, %s272
        %s276 = smul.addr %s275, 8
        %s277 = scalar_lea.vmem %s4, %s276
        %s278 = sadd.s32 %s23, %s24
        %p279 = scmp.lt.s32.totalorder %s22, 1
        %s280 = scalar_select %p279, %s22, 1
        %p281 = scmp.lt.s32.totalorder %s278, 0
        %s282 = scalar_select %p281, %s278, 0
        %s283 = smul.addr %s280, 3
        %s284 = sadd.s32 %s282, %s283
        %s285 = smul.addr %s284, 8
        %s286 = scalar_lea.vmem %s1, %s285
        %s287 = sadd.s32 %s23, %s24
        %s288 = sadd.s32 %s23, %s24
        %p289 = scmp.lt.s32.totalorder %s22, 1
        %s290 = scalar_select %p289, %s22, 1
        %p291 = scmp.lt.s32.totalorder %s288, 0
        %s292 = scalar_select %p291, %s288, 0
        %s293 = smul.addr %s290, 3
        %s294 = sadd.s32 %s292, %s293
        %s295 = smul.addr %s294, 8
        %s296 = scalar_lea.vmem %s2, %s295
        %s297 = sadd.s32 %s23, %s24
        %p298 = scmp.lt.s32.totalorder %s22, 1
        %s299 = scalar_select %p298, %s22, 1
        %p300 = scmp.lt.s32.totalorder %s23, 0
        %s301 = scalar_select %p300, %s23, 0
        %s302 = sadd.s32 %s301, %s299
        %s303 = smul.addr %s302, 8
        %s304 = scalar_lea.vmem %s3, %s303
        %p305 = scmp.lt.s32.totalorder %s22, 1
        %s306 = scalar_select %p305, %s22, 1
        %p307 = scmp.lt.s32.totalorder %s23, 0
        %s308 = scalar_select %p307, %s23, 0
        %s309 = sadd.s32 %s308, %s306
        %s310 = smul.addr %s309, 8
        %s311 = scalar_lea.vmem %s4, %s310
        %p312 = scmp.eq.s32.totalorder %s24, 0
        // Predicated region
        $region37: #{vae_loss.1} parent=31 // pred_check
          %p313 = pneg %p312
        $region38: #{vae_loss.1} parent=31 // pred_check_branch
          %315 = sbr.rel (%p313) target = $region40
        $region39: #{vae_loss.1} parent=31 // pred_region
          %316 = vst [vmem:[%s304] sm:$0xff] 0.0
          %317 = vst [vmem:[%s311] sm:$0xff] 0.0
        $region40: #{vae_loss.1} parent=31 // pred_fallthru
          _
        %s318 = sld [smem:[#allocation2]]
        %s319 = sld [smem:[#allocation2 + $0x1]]
        %s320 = sld [smem:[#allocation2 + $0x2]]
        %v321 = vld [vmem:[%s286] sm:$0xff]
        %s322 = scalar_lea.vmem %s286, 8
        %v323 = vld [vmem:[%s322] sm:$0xff]
        %s324 = scalar_lea.vmem %s286, 16
        %v325 = vld [vmem:[%s324] sm:$0xff]
        %v326 = vld [vmem:[%s296] sm:$0xff]
        %s327 = scalar_lea.vmem %s296, 8
        %v328 = vld [vmem:[%s327] sm:$0xff]
        %s329 = scalar_lea.vmem %s296, 16
        %v330 = vld [vmem:[%s329] sm:$0xff]
        %v331 = vsub.f32 %v321, %v326
        %v332 = vand.u32 2147483647, %v331
        %v333 = vsub.f32 %v323, %v328
        %v334 = vand.u32 2147483647, %v333
        %v335 = vadd.f32 %v332, %v334
        %v336 = vsub.f32 %v325, %v330
        %v337 = vand.u32 2147483647, %v336
        %v338 = vadd.f32 %v335, %v337
        %v339 = vmul.f32 %v321, %v321
        %v340 = vmul.f32 %v326, %v326
        %v341 = vmul.f32 %v323, %v323
        %v342 = vadd.f32 %v339, %v341
        %v343 = vmul.f32 %v328, %v328
        %v344 = vadd.f32 %v340, %v343
        %v345 = vmul.f32 %v325, %v325
        %v346 = vadd.f32 %v342, %v345
        %v347 = vmul.f32 %v330, %v330
        %v348 = vadd.f32 %v344, %v347
        %v349 = vadd.f32 %v346, 1e-10
        %v350 = vrsqrt.pop %v349
        %v351 = vmul.f32 %v350, %v349
        %v352 = vmul.f32 %v351, %v350
        %v353 = vmul.f32 0.5, %v352
        %v354 = vsub.f32 1.5, %v353
        %v355 = vmul.f32 %v350, %v354
        %vm356 = vweird.f32 %v349
        %vm357 = vweird.f32 %v350
        %vm358 = vmor %vm356, %vm357
        %v359 = vsel %vm358, %v350, %v355
        %v360 = vadd.f32 %v348, 1e-10
        %v361 = vrsqrt.pop %v360
        %v362 = vmul.f32 %v361, %v360
        %v363 = vmul.f32 %v362, %v361
        %v364 = vmul.f32 0.5, %v363
        %v365 = vsub.f32 1.5, %v364
        %v366 = vmul.f32 %v361, %v365
        %vm367 = vweird.f32 %v360
        %vm368 = vweird.f32 %v361
        %vm369 = vmor %vm367, %vm368
        %v370 = vsel %vm369, %v361, %v366
        %v371 = vmul.f32 %v321, %v359
        %v372 = vmul.f32 %v326, %v370
        %v373 = vsub.f32 %v371, %v372
        %v374 = vmul.f32 %v373, %v373
        %v375 = vstv %s318
        %v376 = vmul.f32 %v375, %v374
        %v377 = vmul.f32 %v323, %v359
        %v378 = vmul.f32 %v328, %v370
        %v379 = vsub.f32 %v377, %v378
        %v380 = vmul.f32 %v379, %v379
        %v381 = vstv %s319
        %v382 = vmul.f32 %v381, %v380
        %v383 = vadd.f32 %v376, %v382
        %v384 = vmul.f32 %v325, %v359
        %v385 = vmul.f32 %v330, %v370
        %v386 = vsub.f32 %v384, %v385
        %v387 = vmul.f32 %v386, %v386
        %v388 = vstv %s320
        %v389 = vmul.f32 %v388, %v387
        %v390 = vadd.f32 %v383, %v389
        %v391 = vadd.f32 %v338, 0.0
        %v392 = vadd.f32 %v390, 0.0
        %v393 = vld [vmem:[%s304] sm:$0xff]
        %v394 = vadd.f32 %v393, %v391
        %395 = vst [vmem:[%s304] sm:$0xff] %v394
        %v396 = vld [vmem:[%s311] sm:$0xff]
        %v397 = vadd.f32 %v396, %v392
        %398 = vst [vmem:[%s311] sm:$0xff] %v397
        %p399 = scmp.lt.s32.totalorder %s22, 1
        %s400 = scalar_select %p399, %s22, 1
        %p401 = scmp.lt.s32.totalorder %s23, 0
        %s402 = scalar_select %p401, %s23, 0
        %s403 = sadd.s32 %s402, %s400
        %s404 = smul.addr %s403, 8
        %s405 = scalar_lea.vmem %s3, %s404
        %p406 = scmp.lt.s32.totalorder %s22, 1
        %s407 = scalar_select %p406, %s22, 1
        %p408 = scmp.lt.s32.totalorder %s23, 0
        %s409 = scalar_select %p408, %s23, 0
        %s410 = sadd.s32 %s409, %s407
        %s411 = smul.addr %s410, 8
        %s412 = scalar_lea.vmem %s4, %s411
        // Predicated region
        $region41: #{vae_loss.1} parent=31 // pred_check
          %p413 = pneg %p137
        $region42: #{vae_loss.1} parent=31 // pred_check_branch
          %415 = sbr.rel (%p413) target = $region44
        $region43: #{vae_loss.1} parent=31 // pred_region
          _
        $region44: #{vae_loss.1} parent=31 // pred_fallthru
          _
        // Predicated region
        $region45: #{vae_loss.1} parent=31 // pred_check
          %p416 = pneg %p165
        $region46: #{vae_loss.1} parent=31 // pred_check_branch
          %418 = sbr.rel (%p416) target = $region48
        $region47: #{vae_loss.1} parent=31 // pred_region
          _
        $region48: #{vae_loss.1} parent=31 // pred_fallthru
          _
      $region32: #{vae_loss.1} parent=5 // pred_fallthru
        _
      %p419 = scmp.le.s32.totalorder 2, %s12
      // Predicated region
      $region49: #{vae_loss.1} parent=5 // pred_check
        %p420 = pneg %p419
      $region50: #{vae_loss.1} parent=5 // pred_check_branch
        %422 = sbr.rel (%p420) target = $region52
      $region51: #{vae_loss.1} parent=5 // pred_region
        %s423 = ssub.s32 %s12, 2
        // Predicated region
        $region53: #{vae_loss.1} parent=51 // pred_check
          %p424 = pneg %p143
        $region54: #{vae_loss.1} parent=51 // pred_check_branch
          %426 = sbr.rel (%p424) target = $region56
        $region55: #{vae_loss.1} parent=51 // pred_region
          %p427 = scmp.lt.s32.totalorder %s25, 1
          %s428 = scalar_select %p427, %s25, 1
          %p429 = scmp.lt.s32.totalorder %s26, 0
          %s430 = scalar_select %p429, %s26, 0
          %s431 = sadd.s32 %s430, %s428
          %s432 = smul.addr %s431, 8
          %s433 = scalar_lea.vmem %s3, %s432
        $region56: #{vae_loss.1} parent=51 // pred_fallthru
          _
        // Predicated region
        $region57: #{vae_loss.1} parent=51 // pred_check
          %p434 = pneg %p171
        $region58: #{vae_loss.1} parent=51 // pred_check_branch
          %436 = sbr.rel (%p434) target = $region60
        $region59: #{vae_loss.1} parent=51 // pred_region
          %p437 = scmp.lt.s32.totalorder %s25, 1
          %s438 = scalar_select %p437, %s25, 1
          %p439 = scmp.lt.s32.totalorder %s26, 0
          %s440 = scalar_select %p439, %s26, 0
          %s441 = sadd.s32 %s440, %s438
          %s442 = smul.addr %s441, 8
          %s443 = scalar_lea.vmem %s4, %s442
        $region60: #{vae_loss.1} parent=51 // pred_fallthru
          _
      $region52: #{vae_loss.1} parent=5 // pred_fallthru
        _
    $region6: #{vae_loss.1} parent=1 // loop_footer
      %s16 = sadd.s32 1, %s12
    $region7: #{vae_loss.1} parent=1 // loop_footer_branch
      %11 = sbr.rel target = $region3
    $region8: #{vae_loss.1} parent=1 // loop_exit
      _
    %444 = vsyncpa [#allocation3], 1
    %s445 = scalar_lea.sflag [#allocation3], 1
    %446 = vsyncpa %s445, 1

</llo_original>
